<compile_context>
chip_gen: v7x
topology: tpu7x:2x2x1
jax: 0.10.0
libtpu: 0.0.40
codegen_flags: <defaults>
</compile_context>

<pallas_src>
import jax
import jax.numpy as jnp
from jax import lax
from jax.experimental import pallas as pl
from jax.experimental.pallas import tpu as pltpu

INPUT_SIZE = 1
HIDDEN = 64
NUM_LAYERS = 2          # hard-coded 2 stacked layers (matches module default)
NUM_CLASSES = 4


def rnn_kernel(x_ref,       # (T, B, 1)   time-major input
               wih0_ref,    # (1, 1, H)   layer-0 input weight row (input_size == 1)
               b0_ref,      # (1, 1, H)   b_ih0 + b_hh0
               wpack_ref,   # (2H, 2H)    [[Whh0^T, Wih1^T], [0, Whh1^T]]
               b1_ref,      # (1, 1, H)   b_ih1 + b_hh1
               wfc_ref,     # (2H, C)     [0 ; Wfc^T]  (zero rows discard the h0 half)
               bfc_ref,     # (1, C)      fc bias
               out_ref,     # (B, C)
               pre_ref):    # scratch: (T+1, B, 2H) hoisted per-wave additive terms
    T, B, _ = x_ref.shape
    H = HIDDEN

    # ---- one-time pre-compute (off the serial chain): wave additive terms ----
    # xb[t] = x[t] * Wih0 + (b_ih0 + b_hh0)     (input_size == 1 -> pure VPU broadcast)
    xb = x_ref[...] * wih0_ref[...] + b0_ref[...]                     # (T, B, H)
    zero_bh = jnp.zeros((1, B, H), jnp.float32)
    left = jnp.concatenate([xb, zero_bh], axis=0)                     # xb[0..T-1], 0
    right = jnp.concatenate(
        [zero_bh, jnp.broadcast_to(b1_ref[...], (T, B, H))], axis=0)  # 0, b1, ..., b1
    pre_ref[...] = jnp.concatenate([left, right], axis=-1)            # (T+1, B, 2H)

    wpack = wpack_ref[...]                                            # loop-invariant RHS

    # ---- wavefront recurrence: hpack(s) = [h0(s) | h1(s-1)] ----
    # prologue (step 0 peeled, h_init = 0):  hpack = [tanh(xb[0]) | tanh(0) = 0]
    hpack0 = jnp.tanh(pre_ref[0])                                     # (B, 2H)

    def step(s, h):
        z = jnp.dot(h, wpack, preferred_element_type=jnp.float32)     # (8,128)x(128,128)
        return jnp.tanh(z + pre_ref[s])

    # T waves; after the last, hpack = [discarded h0(T) | h1(T-1)]
    h_last = lax.fori_loop(1, T + 1, step, hpack0, unroll=True)

    # fc: zero-padded weight rows select the h1 half -> out = h1(T-1) @ Wfc^T + bfc
    out_ref[...] = (jnp.dot(h_last, wfc_ref[...], preferred_element_type=jnp.float32)
                    + bfc_ref[...]).astype(out_ref.dtype)


def rnn_model_forward(x, kparams):
    """x: (B, input_size, T) float32, exactly like the PyTorch module's input."""
    B = x.shape[0]
    T = x.shape[2]
    # PyTorch: x.permute(0,2,1) -> (B, T, I); kernel wants time-major (T, B, I).
    x_tm = jnp.transpose(x, (2, 0, 1)).astype(jnp.float32)

    vmem = pl.BlockSpec(memory_space=pltpu.MemorySpace.VMEM)
    args = (x_tm,
            kparams["wih0_row"], kparams["b0"],
            kparams["wpack"], kparams["b1"],
            kparams["wfc_pad"], kparams["bfc"])

    # Grid-less single invocation: the whole problem (~100 KiB) is VMEM-resident.
    # TODO(synk): if B grows (>=16), add a "parallel" grid axis over batch blocks
    # (v7x megacore); if T grows large, tile T / cap the unroll so the (T+1,B,128)
    # scratch stays inside v7x's 64 MiB VMEM.
    return pl.pallas_call(
        rnn_kernel,
        out_shape=jax.ShapeDtypeStruct((B, NUM_CLASSES), jnp.float32),
        in_specs=[vmem] * len(args),
        out_specs=vmem,
        scratch_shapes=[pltpu.VMEM((T + 1, B, 2 * HIDDEN), jnp.float32)],
    )(*args)


def init_raw_params(key):
    """PyTorch-style U(-1/sqrt(H), 1/sqrt(H)) init for nn.RNN(1,64,2) + nn.Linear(64,4)."""
    bound = 1.0 / (HIDDEN ** 0.5)
    keys = jax.random.split(key, 12)

    def u(k, shape):
        return jax.random.uniform(k, shape, jnp.float32, -bound, bound)

    return {
        # nn.RNN layer 0
        "w_ih0": u(keys[0], (HIDDEN, INPUT_SIZE)), "w_hh0": u(keys[1], (HIDDEN, HIDDEN)),
        "b_ih0": u(keys[2], (HIDDEN,)),            "b_hh0": u(keys[3], (HIDDEN,)),
        # nn.RNN layer 1
        "w_ih1": u(keys[4], (HIDDEN, HIDDEN)),     "w_hh1": u(keys[5], (HIDDEN, HIDDEN)),
        "b_ih1": u(keys[6], (HIDDEN,)),            "b_hh1": u(keys[7], (HIDDEN,)),
        # nn.Linear(hidden, num_classes)
        "w_fc": u(keys[8], (NUM_CLASSES, HIDDEN)), "b_fc": u(keys[9], (NUM_CLASSES,)),
    }


def prepare_kernel_params(raw):
    """Pre-transpose / pre-pack weights into the layout the kernel consumes."""
    H = HIDDEN
    # Packed wavefront weight: [[Whh0^T, Wih1^T], [0, Whh1^T]]  (2H, 2H)
    wpack = jnp.zeros((2 * H, 2 * H), jnp.float32)
    wpack = wpack.at[:H, :H].set(raw["w_hh0"].T)
    wpack = wpack.at[:H, H:].set(raw["w_ih1"].T)
    wpack = wpack.at[H:, H:].set(raw["w_hh1"].T)
    # FC weight zero-padded over the h0 half: (2H, C)
    wfc_pad = jnp.concatenate(
        [jnp.zeros((H, NUM_CLASSES), jnp.float32), raw["w_fc"].T], axis=0)
    return {
        "wih0_row": raw["w_ih0"].T.reshape(1, 1, H),                  # (1,1,H)
        "b0":       (raw["b_ih0"] + raw["b_hh0"]).reshape(1, 1, H),   # (1,1,H)
        "wpack":    wpack,                                            # (2H,2H)
        "b1":       (raw["b_ih1"] + raw["b_hh1"]).reshape(1, 1, H),   # (1,1,H)
        "wfc_pad":  wfc_pad,                                          # (2H,C)
        "bfc":      raw["b_fc"].reshape(1, NUM_CLASSES),              # (1,C)
    }


def rnn_reference(x, raw):
    """Pure-JAX mirror of nn.RNN(batch_first=True, num_layers=2) + Linear."""
    xs = jnp.transpose(x, (0, 2, 1)).astype(jnp.float32)   # (B, T, I)
    B, T, _ = xs.shape
    h0 = jnp.zeros((B, HIDDEN), jnp.float32)
    h1 = jnp.zeros((B, HIDDEN), jnp.float32)
    for t in range(T):
        xt = xs[:, t, :]
        h0 = jnp.tanh(xt @ raw["w_ih0"].T + raw["b_ih0"] + h0 @ raw["w_hh0"].T + raw["b_hh0"])
        h1 = jnp.tanh(h0 @ raw["w_ih1"].T + raw["b_ih1"] + h1 @ raw["w_hh1"].T + raw["b_hh1"])
    return h1 @ raw["w_fc"].T + raw["b_fc"]


if __name__ == "__main__":
    key = jax.random.PRNGKey(0)
    pkey, xkey = jax.random.split(key)
    raw = init_raw_params(pkey)
    kparams = prepare_kernel_params(raw)

    B, T = 8, 8   # B multiple of 8 fills sublanes / MXU rows
    # Raw module input: (batch, input_size, seq_len), matching x.permute(0,2,1) in forward.
    x = jax.random.normal(xkey, (B, INPUT_SIZE, T), jnp.float32)

    out = rnn_model_forward(x, kparams)
    out = jax.block_until_ready(out)

    assert out.shape == (B, NUM_CLASSES)
    assert out.dtype == jnp.float32

    ref = jax.block_until_ready(rnn_reference(x, raw))
    assert jnp.allclose(out, ref, atol=1e-3, rtol=1e-3), "kernel/reference mismatch"

    print("KERNEL_OK")
</pallas_src>

<mosaic_0001>
module attributes {stable_mosaic.version = 11 : i64} {
  func.func @rnn_kernel(%arg0: memref<8x8x1xf32, #tpu.memory_space<vmem>>, %arg1: memref<1x1x64xf32, #tpu.memory_space<vmem>>, %arg2: memref<1x1x64xf32, #tpu.memory_space<vmem>>, %arg3: memref<128x128xf32, #tpu.memory_space<vmem>>, %arg4: memref<1x1x64xf32, #tpu.memory_space<vmem>>, %arg5: memref<128x4xf32, #tpu.memory_space<vmem>>, %arg6: memref<1x4xf32, #tpu.memory_space<vmem>>, %arg7: memref<8x4xf32, #tpu.memory_space<vmem>>, %arg8: memref<9x8x128xf32, #tpu.memory_space<vmem>>) attributes {dimension_semantics = [], scalar_prefetch = 0 : i64, scratch_operands = 1 : i64, tpu.core_type = #tpu.core_type<tc>} {
    %c0 = arith.constant 0 : index
    %c0_0 = arith.constant 0 : index
    %c0_1 = arith.constant 0 : index
    %0 = vector.load %arg0[%c0, %c0_0, %c0_1] : memref<8x8x1xf32, #tpu.memory_space<vmem>>, vector<8x8x1xf32>
    %c0_2 = arith.constant 0 : index
    %c0_3 = arith.constant 0 : index
    %c0_4 = arith.constant 0 : index
    %1 = vector.load %arg1[%c0_2, %c0_3, %c0_4] : memref<1x1x64xf32, #tpu.memory_space<vmem>>, vector<1x1x64xf32>
    %2 = vector.broadcast %0 : vector<8x8x1xf32> to vector<8x8x64xf32>
    %3 = vector.broadcast %1 : vector<1x1x64xf32> to vector<8x8x64xf32>
    %4 = arith.mulf %2, %3 : vector<8x8x64xf32>
    %c0_5 = arith.constant 0 : index
    %c0_6 = arith.constant 0 : index
    %c0_7 = arith.constant 0 : index
    %5 = vector.load %arg2[%c0_5, %c0_6, %c0_7] : memref<1x1x64xf32, #tpu.memory_space<vmem>>, vector<1x1x64xf32>
    %6 = vector.broadcast %5 : vector<1x1x64xf32> to vector<8x8x64xf32>
    %7 = arith.addf %4, %6 : vector<8x8x64xf32>
    %cst = arith.constant 0.000000e+00 : f32
    %8 = vector.broadcast %cst : f32 to vector<1x8x64xf32>
    %9 = tpu.concatenate %7, %8 in 0 : vector<8x8x64xf32>, vector<1x8x64xf32> -> vector<9x8x64xf32>
    %c0_8 = arith.constant 0 : index
    %c0_9 = arith.constant 0 : index
    %c0_10 = arith.constant 0 : index
    %10 = vector.load %arg4[%c0_8, %c0_9, %c0_10] : memref<1x1x64xf32, #tpu.memory_space<vmem>>, vector<1x1x64xf32>
    %11 = vector.shape_cast %10 : vector<1x1x64xf32> to vector<1x1x64xf32>
    %12 = vector.broadcast %11 : vector<1x1x64xf32> to vector<8x8x64xf32>
    %13 = tpu.concatenate %8, %12 in 0 : vector<1x8x64xf32>, vector<8x8x64xf32> -> vector<9x8x64xf32>
    %14 = tpu.concatenate %9, %13 in 2 : vector<9x8x64xf32>, vector<9x8x64xf32> -> vector<9x8x128xf32>
    %c0_11 = arith.constant 0 : index
    %c0_12 = arith.constant 0 : index
    %c0_13 = arith.constant 0 : index
    %15 = vector.load %arg8[%c0_11, %c0_12, %c0_13] : memref<9x8x128xf32, #tpu.memory_space<vmem>>, vector<9x8x128xf32>
    tpu.vector_store %arg8[%c0_11, %c0_12, %c0_13], %14 {strides = array<i32>} : memref<9x8x128xf32, #tpu.memory_space<vmem>>, vector<9x8x128xf32>,
    %c0_14 = arith.constant 0 : index
    %c0_15 = arith.constant 0 : index
    %16 = vector.load %arg3[%c0_14, %c0_15] : memref<128x128xf32, #tpu.memory_space<vmem>>, vector<128x128xf32>
    %c0_16 = arith.constant 0 : index
    %c0_17 = arith.constant 0 : index
    %c0_18 = arith.constant 0 : index
    %17 = vector.load %arg8[%c0_16, %c0_17, %c0_18] : memref<9x8x128xf32, #tpu.memory_space<vmem>>, vector<1x8x128xf32>
    %18 = vector.shape_cast %17 : vector<1x8x128xf32> to vector<8x128xf32>
    %19 = math.tanh %18 : vector<8x128xf32>
    %c1_i32 = arith.constant 1 : i32
    %cst_19 = arith.constant dense<0.000000e+00> : vector<8x128xf32>
    %20 = tpu.matmul %19, %16, %cst_19 {dimension_numbers = #tpu.dot_dimension_numbers<[1], [0], [0], [1], [0, 0, 1, 1], [], []>} : vector<8x128xf32>, vector<128x128xf32>, vector<8x128xf32> -> vector<8x128xf32>
    %21 = arith.index_cast %c1_i32 : i32 to index
    %c0_20 = arith.constant 0 : index
    %c0_21 = arith.constant 0 : index
    %22 = vector.load %arg8[%21, %c0_20, %c0_21] : memref<9x8x128xf32, #tpu.memory_space<vmem>>, vector<1x8x128xf32>
    %23 = vector.shape_cast %22 : vector<1x8x128xf32> to vector<8x128xf32>
    %24 = arith.addf %20, %23 : vector<8x128xf32>
    %25 = math.tanh %24 : vector<8x128xf32>
    %c2_i32 = arith.constant 2 : i32
    %cst_22 = arith.constant dense<0.000000e+00> : vector<8x128xf32>
    %26 = tpu.matmul %25, %16, %cst_22 {dimension_numbers = #tpu.dot_dimension_numbers<[1], [0], [0], [1], [0, 0, 1, 1], [], []>} : vector<8x128xf32>, vector<128x128xf32>, vector<8x128xf32> -> vector<8x128xf32>
    %27 = arith.index_cast %c2_i32 : i32 to index
    %c0_23 = arith.constant 0 : index
    %c0_24 = arith.constant 0 : index
    %28 = vector.load %arg8[%27, %c0_23, %c0_24] : memref<9x8x128xf32, #tpu.memory_space<vmem>>, vector<1x8x128xf32>
    %29 = vector.shape_cast %28 : vector<1x8x128xf32> to vector<8x128xf32>
    %30 = arith.addf %26, %29 : vector<8x128xf32>
    %31 = math.tanh %30 : vector<8x128xf32>
    %c3_i32 = arith.constant 3 : i32
    %cst_25 = arith.constant dense<0.000000e+00> : vector<8x128xf32>
    %32 = tpu.matmul %31, %16, %cst_25 {dimension_numbers = #tpu.dot_dimension_numbers<[1], [0], [0], [1], [0, 0, 1, 1], [], []>} : vector<8x128xf32>, vector<128x128xf32>, vector<8x128xf32> -> vector<8x128xf32>
    %33 = arith.index_cast %c3_i32 : i32 to index
    %c0_26 = arith.constant 0 : index
    %c0_27 = arith.constant 0 : index
    %34 = vector.load %arg8[%33, %c0_26, %c0_27] : memref<9x8x128xf32, #tpu.memory_space<vmem>>, vector<1x8x128xf32>
    %35 = vector.shape_cast %34 : vector<1x8x128xf32> to vector<8x128xf32>
    %36 = arith.addf %32, %35 : vector<8x128xf32>
    %37 = math.tanh %36 : vector<8x128xf32>
    %c4_i32 = arith.constant 4 : i32
    %cst_28 = arith.constant dense<0.000000e+00> : vector<8x128xf32>
    %38 = tpu.matmul %37, %16, %cst_28 {dimension_numbers = #tpu.dot_dimension_numbers<[1], [0], [0], [1], [0, 0, 1, 1], [], []>} : vector<8x128xf32>, vector<128x128xf32>, vector<8x128xf32> -> vector<8x128xf32>
    %39 = arith.index_cast %c4_i32 : i32 to index
    %c0_29 = arith.constant 0 : index
    %c0_30 = arith.constant 0 : index
    %40 = vector.load %arg8[%39, %c0_29, %c0_30] : memref<9x8x128xf32, #tpu.memory_space<vmem>>, vector<1x8x128xf32>
    %41 = vector.shape_cast %40 : vector<1x8x128xf32> to vector<8x128xf32>
    %42 = arith.addf %38, %41 : vector<8x128xf32>
    %43 = math.tanh %42 : vector<8x128xf32>
    %c5_i32 = arith.constant 5 : i32
    %cst_31 = arith.constant dense<0.000000e+00> : vector<8x128xf32>
    %44 = tpu.matmul %43, %16, %cst_31 {dimension_numbers = #tpu.dot_dimension_numbers<[1], [0], [0], [1], [0, 0, 1, 1], [], []>} : vector<8x128xf32>, vector<128x128xf32>, vector<8x128xf32> -> vector<8x128xf32>
    %45 = arith.index_cast %c5_i32 : i32 to index
    %c0_32 = arith.constant 0 : index
    %c0_33 = arith.constant 0 : index
    %46 = vector.load %arg8[%45, %c0_32, %c0_33] : memref<9x8x128xf32, #tpu.memory_space<vmem>>, vector<1x8x128xf32>
    %47 = vector.shape_cast %46 : vector<1x8x128xf32> to vector<8x128xf32>
    %48 = arith.addf %44, %47 : vector<8x128xf32>
    %49 = math.tanh %48 : vector<8x128xf32>
    %c6_i32 = arith.constant 6 : i32
    %cst_34 = arith.constant dense<0.000000e+00> : vector<8x128xf32>
    %50 = tpu.matmul %49, %16, %cst_34 {dimension_numbers = #tpu.dot_dimension_numbers<[1], [0], [0], [1], [0, 0, 1, 1], [], []>} : vector<8x128xf32>, vector<128x128xf32>, vector<8x128xf32> -> vector<8x128xf32>
    %51 = arith.index_cast %c6_i32 : i32 to index
    %c0_35 = arith.constant 0 : index
    %c0_36 = arith.constant 0 : index
    %52 = vector.load %arg8[%51, %c0_35, %c0_36] : memref<9x8x128xf32, #tpu.memory_space<vmem>>, vector<1x8x128xf32>
    %53 = vector.shape_cast %52 : vector<1x8x128xf32> to vector<8x128xf32>
    %54 = arith.addf %50, %53 : vector<8x128xf32>
    %55 = math.tanh %54 : vector<8x128xf32>
    %c7_i32 = arith.constant 7 : i32
    %cst_37 = arith.constant dense<0.000000e+00> : vector<8x128xf32>
    %56 = tpu.matmul %55, %16, %cst_37 {dimension_numbers = #tpu.dot_dimension_numbers<[1], [0], [0], [1], [0, 0, 1, 1], [], []>} : vector<8x128xf32>, vector<128x128xf32>, vector<8x128xf32> -> vector<8x128xf32>
    %57 = arith.index_cast %c7_i32 : i32 to index
    %c0_38 = arith.constant 0 : index
    %c0_39 = arith.constant 0 : index
    %58 = vector.load %arg8[%57, %c0_38, %c0_39] : memref<9x8x128xf32, #tpu.memory_space<vmem>>, vector<1x8x128xf32>
    %59 = vector.shape_cast %58 : vector<1x8x128xf32> to vector<8x128xf32>
    %60 = arith.addf %56, %59 : vector<8x128xf32>
    %61 = math.tanh %60 : vector<8x128xf32>
    %c8_i32 = arith.constant 8 : i32
    %cst_40 = arith.constant dense<0.000000e+00> : vector<8x128xf32>
    %62 = tpu.matmul %61, %16, %cst_40 {dimension_numbers = #tpu.dot_dimension_numbers<[1], [0], [0], [1], [0, 0, 1, 1], [], []>} : vector<8x128xf32>, vector<128x128xf32>, vector<8x128xf32> -> vector<8x128xf32>
    %63 = arith.index_cast %c8_i32 : i32 to index
    %c0_41 = arith.constant 0 : index
    %c0_42 = arith.constant 0 : index
    %64 = vector.load %arg8[%63, %c0_41, %c0_42] : memref<9x8x128xf32, #tpu.memory_space<vmem>>, vector<1x8x128xf32>
    %65 = vector.shape_cast %64 : vector<1x8x128xf32> to vector<8x128xf32>
    %66 = arith.addf %62, %65 : vector<8x128xf32>
    %67 = math.tanh %66 : vector<8x128xf32>
    %c8_i32_43 = arith.constant 8 : i32
    %c0_44 = arith.constant 0 : index
    %c0_45 = arith.constant 0 : index
    %68 = vector.load %arg5[%c0_44, %c0_45] : memref<128x4xf32, #tpu.memory_space<vmem>>, vector<128x4xf32>
    %cst_46 = arith.constant dense<0.000000e+00> : vector<8x4xf32>
    %69 = tpu.matmul %67, %68, %cst_46 {dimension_numbers = #tpu.dot_dimension_numbers<[1], [0], [0], [1], [0, 0, 1, 1], [], []>} : vector<8x128xf32>, vector<128x4xf32>, vector<8x4xf32> -> vector<8x4xf32>
    %c0_47 = arith.constant 0 : index
    %c0_48 = arith.constant 0 : index
    %70 = vector.load %arg6[%c0_47, %c0_48] : memref<1x4xf32, #tpu.memory_space<vmem>>, vector<1x4xf32>
    %71 = vector.broadcast %70 : vector<1x4xf32> to vector<8x4xf32>
    %72 = arith.addf %69, %71 : vector<8x4xf32>
    %c0_49 = arith.constant 0 : index
    %c0_50 = arith.constant 0 : index
    %73 = vector.load %arg7[%c0_49, %c0_50] : memref<8x4xf32, #tpu.memory_space<vmem>>, vector<8x4xf32>
    tpu.vector_store %arg7[%c0_49, %c0_50], %72 {strides = array<i32>} : memref<8x4xf32, #tpu.memory_space<vmem>>, vector<8x4xf32>,
    return
  }
}

</mosaic_0001>

<llo_original>
// kernel: tpu_custom_call.1
$region0: #{tpu_custom_call.1}
  #allocation0 [shape = 'u32[]', space=smem, size = 0x4, offset = 0x4, fixed_abs, tag = 'smem constant byte address 0x4 - core index']
  #allocation1 [shape = 'u32[144,128]{1,0:T(1,128)}', space=vmem, size = 0x12000, scoped, tag = 'internal scratch']
  #allocation2 [shape = 'f32[9,8,128]{2,1,0:T(8,128)}', space=vmem, size = 0x9000, scoped, tag = 'scratch operand']
  %s0 = inlined_call_operand.vmem [shape: f32[8,8,1], index: 0, kind: input, shape index: {}]
  %s1 = inlined_call_operand.vmem [shape: f32[1,1,64], index: 1, kind: input, shape index: {}]
  %s2 = inlined_call_operand.vmem [shape: f32[1,1,64], index: 2, kind: input, shape index: {}]
  %s3 = inlined_call_operand.vmem [shape: f32[128,128], index: 3, kind: input, shape index: {}]
  %s4 = inlined_call_operand.vmem [shape: f32[1,1,64], index: 4, kind: input, shape index: {}]
  %s5 = inlined_call_operand.vmem [shape: f32[128,4], index: 5, kind: input, shape index: {}]
  %s6 = inlined_call_operand.vmem [shape: f32[1,4], index: 6, kind: input, shape index: {}]
  %s7 = inlined_call_operand.vmem [shape: f32[8,4], index: 7, kind: output, shape index: {}]
  %s8 = sld [smem:[#allocation0]]
  $region38: #{tpu_custom_call.1} parent=0
    _
  %s10 = ssub.s32 1, %s8
  %s11 = scalar_select 0, %s10, %s8
  // Predicated region
  $region2: #{tpu_custom_call.1} parent=0 // pred_check
    _
  $region3: #{tpu_custom_call.1} parent=0 // pred_check_branch
    %13 = sbr.rel (0) target = $region5
  $region4: #{tpu_custom_call.1} parent=0 // pred_region
    _
  $region5: #{tpu_custom_call.1} parent=0 // pred_fallthru
    _
  // Predicated region
  $region6: #{tpu_custom_call.1} parent=0 // pred_check
    _
  $region7: #{tpu_custom_call.1} parent=0 // pred_check_branch
    %15 = sbr.rel (0) target = $region9
  $region8: #{tpu_custom_call.1} parent=0 // pred_region
    _
  $region9: #{tpu_custom_call.1} parent=0 // pred_fallthru
    _
  // Predicated region
  $region10: #{tpu_custom_call.1} parent=0 // pred_check
    _
  $region11: #{tpu_custom_call.1} parent=0 // pred_check_branch
    %17 = sbr.rel (0) target = $region13
  $region12: #{tpu_custom_call.1} parent=0 // pred_region
    _
  $region13: #{tpu_custom_call.1} parent=0 // pred_fallthru
    _
  // Predicated region
  $region14: #{tpu_custom_call.1} parent=0 // pred_check
    _
  $region15: #{tpu_custom_call.1} parent=0 // pred_check_branch
    %19 = sbr.rel (0) target = $region17
  $region16: #{tpu_custom_call.1} parent=0 // pred_region
    _
  $region17: #{tpu_custom_call.1} parent=0 // pred_fallthru
    _
  // Predicated region
  $region18: #{tpu_custom_call.1} parent=0 // pred_check
    _
  $region19: #{tpu_custom_call.1} parent=0 // pred_check_branch
    %21 = sbr.rel (0) target = $region21
  $region20: #{tpu_custom_call.1} parent=0 // pred_region
    _
  $region21: #{tpu_custom_call.1} parent=0 // pred_fallthru
    _
  // Predicated region
  $region22: #{tpu_custom_call.1} parent=0 // pred_check
    _
  $region23: #{tpu_custom_call.1} parent=0 // pred_check_branch
    %23 = sbr.rel (0) target = $region25
  $region24: #{tpu_custom_call.1} parent=0 // pred_region
    _
  $region25: #{tpu_custom_call.1} parent=0 // pred_fallthru
    _
  // Predicated region
  $region26: #{tpu_custom_call.1} parent=0 // pred_check
    _
  $region27: #{tpu_custom_call.1} parent=0 // pred_check_branch
    %25 = sbr.rel (0) target = $region29
  $region28: #{tpu_custom_call.1} parent=0 // pred_region
    _
  $region29: #{tpu_custom_call.1} parent=0 // pred_fallthru
    _
  %v26 = vld [vmem:[%s0] sm:$0xff]
  %v27 = vld [vmem:[%s0 + $0x8] sm:$0xff]
  %v28 = vld [vmem:[%s0 + $0x10] sm:$0xff]
  %v29 = vld [vmem:[%s0 + $0x18] sm:$0xff]
  %v30 = vld [vmem:[%s0 + $0x20] sm:$0xff]
  %v31 = vld [vmem:[%s0 + $0x28] sm:$0xff]
  %v32 = vld [vmem:[%s0 + $0x30] sm:$0xff]
  %v33 = vld [vmem:[%s0 + $0x38] sm:$0xff]
  %v34 = vld [vmem:[%s1] sm:$0x1]
  %36 = vset.pattern.permute.xlu0 0
  %37 = vperm.xlu0 %36, %v26
  %v38 = vpop.permute.xlu0 %37
  %41 = vset.pattern.permute.xlu0 0
  %42 = vperm.xlu0 %41, %v27
  %v43 = vpop.permute.xlu0 %42
  %46 = vset.pattern.permute.xlu0 0
  %47 = vperm.xlu0 %46, %v28
  %v48 = vpop.permute.xlu0 %47
  %51 = vset.pattern.permute.xlu0 0
  %52 = vperm.xlu0 %51, %v29
  %v53 = vpop.permute.xlu0 %52
  %56 = vset.pattern.permute.xlu0 0
  %57 = vperm.xlu0 %56, %v30
  %v58 = vpop.permute.xlu0 %57
  %61 = vset.pattern.permute.xlu0 0
  %62 = vperm.xlu0 %61, %v31
  %v63 = vpop.permute.xlu0 %62
  %66 = vset.pattern.permute.xlu0 0
  %67 = vperm.xlu0 %66, %v32
  %v68 = vpop.permute.xlu0 %67
  %71 = vset.pattern.permute.xlu0 0
  %72 = vperm.xlu0 %71, %v33
  %v73 = vpop.permute.xlu0 %72
  %v76 = vlaneseq
  %v77 = vshrl.u32 %v76, 7
  %v78 = vsub.s32 0, %v77
  %v79 = vrot.slane %v34, %v78
  %v81 = vmul.f32 %v38, %v79
  %v82 = vmul.f32 %v43, %v79
  %v83 = vmul.f32 %v48, %v79
  %v84 = vmul.f32 %v53, %v79
  %v85 = vmul.f32 %v58, %v79
  %v86 = vmul.f32 %v63, %v79
  %v87 = vmul.f32 %v68, %v79
  %v88 = vmul.f32 %v73, %v79
  %v89 = vld [vmem:[%s2] sm:$0x1]
  %v91 = vlaneseq
  %v92 = vshrl.u32 %v91, 7
  %v93 = vsub.s32 0, %v92
  %v94 = vrot.slane %v89, %v93
  %v96 = vadd.f32 %v81, %v94
  %v97 = vadd.f32 %v82, %v94
  %v98 = vadd.f32 %v83, %v94
  %v99 = vadd.f32 %v84, %v94
  %v100 = vadd.f32 %v85, %v94
  %v101 = vadd.f32 %v86, %v94
  %v102 = vadd.f32 %v87, %v94
  %v103 = vadd.f32 %v88, %v94
  %v104 = vld [vmem:[%s4] sm:$0x1]
  %v106 = vlaneseq
  %v107 = vshrl.u32 %v106, 7
  %v108 = vsub.s32 0, %v107
  %v109 = vrot.slane %v104, %v108
  %111 = vrot.lane.b32.xlu0 0.0, 64
  %v112 = vpop.permute.xlu0 %111
  %113 = vrot.lane.b32.xlu0 %v109, 64
  %v114 = vpop.permute.xlu0 %113
  %vm117 = vcmask 523264
  %v118 = vsel %vm117, %v96, %v112
  %v119 = vsel %vm117, %v97, %v114
  %v120 = vsel %vm117, %v98, %v114
  %v121 = vsel %vm117, %v99, %v114
  %v122 = vsel %vm117, %v100, %v114
  %v123 = vsel %vm117, %v101, %v114
  %v124 = vsel %vm117, %v102, %v114
  %v125 = vsel %vm117, %v103, %v114
  %v126 = vsel %vm117, 0.0, %v114
  %127 = vst [vmem:[#allocation2] sm:$0xff] %v118
  %128 = vst [vmem:[#allocation2 + $0x8] sm:$0xff] %v119
  %129 = vst [vmem:[#allocation2 + $0x10] sm:$0xff] %v120
  %130 = vst [vmem:[#allocation2 + $0x18] sm:$0xff] %v121
  %131 = vst [vmem:[#allocation2 + $0x20] sm:$0xff] %v122
  %132 = vst [vmem:[#allocation2 + $0x28] sm:$0xff] %v123
  %133 = vst [vmem:[#allocation2 + $0x30] sm:$0xff] %v124
  %134 = vst [vmem:[#allocation2 + $0x38] sm:$0xff] %v125
  %135 = vst [vmem:[#allocation2 + $0x40] sm:$0xff] %v126
  %v136 = vld [vmem:[%s3] sm:$0xff]
  %v137 = vld [vmem:[%s3 + $0x8] sm:$0xff]
  %v138 = vld [vmem:[%s3 + $0x10] sm:$0xff]
  %v139 = vld [vmem:[%s3 + $0x18] sm:$0xff]
  %v140 = vld [vmem:[%s3 + $0x20] sm:$0xff]
  %v141 = vld [vmem:[%s3 + $0x28] sm:$0xff]
  %v142 = vld [vmem:[%s3 + $0x30] sm:$0xff]
  %v143 = vld [vmem:[%s3 + $0x38] sm:$0xff]
  %v144 = vld [vmem:[%s3 + $0x40] sm:$0xff]
  %v145 = vld [vmem:[%s3 + $0x48] sm:$0xff]
  %v146 = vld [vmem:[%s3 + $0x50] sm:$0xff]
  %v147 = vld [vmem:[%s3 + $0x58] sm:$0xff]
  %v148 = vld [vmem:[%s3 + $0x60] sm:$0xff]
  %v149 = vld [vmem:[%s3 + $0x68] sm:$0xff]
  %v150 = vld [vmem:[%s3 + $0x70] sm:$0xff]
  %v151 = vld [vmem:[%s3 + $0x78] sm:$0xff]
  %v152 = vld [vmem:[#allocation2] sm:$0xff]
  %v153 = vtanh.pop %v152
  %s154 = scalar_lea.vmem [#allocation2], 8
  %v155 = vld [vmem:[%s154] sm:$0xff]
  %156 = vmatprep.subr.mxu0 0.0
  %157 = vmatpush1.msra.mxu0 %v136
  %158 = vmatprep.subr.mxu0 0.0
  %159 = vmatpush1.msra.mxu0 %v137
  %160 = vmatprep.subr.mxu0 0.0
  %161 = vmatpush1.msra.mxu0 %v138
  %162 = vmatprep.subr.mxu0 0.0
  %163 = vmatpush1.msra.mxu0 %v139
  %164 = vmatprep.subr.mxu0 0.0
  %165 = vmatpush1.msra.mxu0 %v140
  %166 = vmatprep.subr.mxu0 0.0
  %167 = vmatpush1.msra.mxu0 %v141
  %168 = vmatprep.subr.mxu0 0.0
  %169 = vmatpush1.msra.mxu0 %v142
  %170 = vmatprep.subr.mxu0 0.0
  %171 = vmatpush1.msra.mxu0 %v143
  %172 = vmatprep.subr.mxu0 0.0
  %173 = vmatpush1.msra.mxu0 %v144
  %174 = vmatprep.subr.mxu0 0.0
  %175 = vmatpush1.msra.mxu0 %v145
  %176 = vmatprep.subr.mxu0 0.0
  %177 = vmatpush1.msra.mxu0 %v146
  %178 = vmatprep.subr.mxu0 0.0
  %179 = vmatpush1.msra.mxu0 %v147
  %180 = vmatprep.subr.mxu0 0.0
  %181 = vmatpush1.msra.mxu0 %v148
  %182 = vmatprep.subr.mxu0 0.0
  %183 = vmatpush1.msra.mxu0 %v149
  %184 = vmatprep.subr.mxu0 0.0
  %185 = vmatpush1.msra.mxu0 %v150
  %186 = vmatprep.subr.mxu0 0.0
  %187 = vmatpush1.msra.mxu0 %v151
  %188 = vmatprep.subr.mxu0 0.0
  %189 = vmatpush1.msra.mxu0 0.0
  %190 = vmatprep.subr.mxu0 0.0
  %191 = vmatpush1.msra.mxu0 0.0
  %192 = vmatprep.subr.mxu0 0.0
  %193 = vmatpush1.msra.mxu0 0.0
  %194 = vmatprep.subr.mxu0 0.0
  %195 = vmatpush1.msra.mxu0 0.0
  %196 = vmatprep.subr.mxu0 0.0
  %197 = vmatpush1.msra.mxu0 0.0
  %198 = vmatprep.subr.mxu0 0.0
  %199 = vmatpush1.msra.mxu0 0.0
  %200 = vmatprep.subr.mxu0 0.0
  %201 = vmatpush1.msra.mxu0 0.0
  %202 = vmatprep.subr.mxu0 0.0
  %203 = vmatpush1.msra.mxu0 0.0
  %204 = vmatprep.subr.mxu0 0.0
  %205 = vmatpush1.msra.mxu0 0.0
  %206 = vmatprep.subr.mxu0 0.0
  %207 = vmatpush1.msra.mxu0 0.0
  %208 = vmatprep.subr.mxu0 0.0
  %209 = vmatpush1.msra.mxu0 0.0
  %210 = vmatprep.subr.mxu0 0.0
  %211 = vmatpush1.msra.mxu0 0.0
  %212 = vmatprep.subr.mxu0 0.0
  %213 = vmatpush1.msra.mxu0 0.0
  %214 = vmatprep.subr.mxu0 0.0
  %215 = vmatpush1.msra.mxu0 0.0
  %216 = vmatprep.subr.mxu0 0.0
  %217 = vmatpush1.msra.mxu0 0.0
  %218 = vmatprep.subr.mxu0 0.0
  %219 = vmatpush1.msra.mxu0 0.0
  %220 = vmatprep.mubr.f32.mxu0 0.0
  %221 = vmatmul.mubr.f32.gmra.mrb[0].mxu0 %v153
  %v222 = vpop.f32.mrb[0].mxu0
  %v223 = vadd.f32 %v155, %v222
  %v224 = vpop.f32.mrb[0].mxu0
  %225 = vdwg.mxu0
  %v226 = vtanh.pop %v223
  %s227 = scalar_lea.vmem [#allocation2], 16
  %v228 = vld [vmem:[%s227] sm:$0xff]
  %229 = vmatprep.subr.mxu0 0.0
  %230 = vmatpush1.msra.mxu0 %v136
  %231 = vmatprep.subr.mxu0 0.0
  %232 = vmatpush1.msra.mxu0 %v137
  %233 = vmatprep.subr.mxu0 0.0
  %234 = vmatpush1.msra.mxu0 %v138
  %235 = vmatprep.subr.mxu0 0.0
  %236 = vmatpush1.msra.mxu0 %v139
  %237 = vmatprep.subr.mxu0 0.0
  %238 = vmatpush1.msra.mxu0 %v140
  %239 = vmatprep.subr.mxu0 0.0
  %240 = vmatpush1.msra.mxu0 %v141
  %241 = vmatprep.subr.mxu0 0.0
  %242 = vmatpush1.msra.mxu0 %v142
  %243 = vmatprep.subr.mxu0 0.0
  %244 = vmatpush1.msra.mxu0 %v143
  %245 = vmatprep.subr.mxu0 0.0
  %246 = vmatpush1.msra.mxu0 %v144
  %247 = vmatprep.subr.mxu0 0.0
  %248 = vmatpush1.msra.mxu0 %v145
  %249 = vmatprep.subr.mxu0 0.0
  %250 = vmatpush1.msra.mxu0 %v146
  %251 = vmatprep.subr.mxu0 0.0
  %252 = vmatpush1.msra.mxu0 %v147
  %253 = vmatprep.subr.mxu0 0.0
  %254 = vmatpush1.msra.mxu0 %v148
  %255 = vmatprep.subr.mxu0 0.0
  %256 = vmatpush1.msra.mxu0 %v149
  %257 = vmatprep.subr.mxu0 0.0
  %258 = vmatpush1.msra.mxu0 %v150
  %259 = vmatprep.subr.mxu0 0.0
  %260 = vmatpush1.msra.mxu0 %v151
  %261 = vmatprep.subr.mxu0 0.0
  %262 = vmatpush1.msra.mxu0 0.0
  %263 = vmatprep.subr.mxu0 0.0
  %264 = vmatpush1.msra.mxu0 0.0
  %265 = vmatprep.subr.mxu0 0.0
  %266 = vmatpush1.msra.mxu0 0.0
  %267 = vmatprep.subr.mxu0 0.0
  %268 = vmatpush1.msra.mxu0 0.0
  %269 = vmatprep.subr.mxu0 0.0
  %270 = vmatpush1.msra.mxu0 0.0
  %271 = vmatprep.subr.mxu0 0.0
  %272 = vmatpush1.msra.mxu0 0.0
  %273 = vmatprep.subr.mxu0 0.0
  %274 = vmatpush1.msra.mxu0 0.0
  %275 = vmatprep.subr.mxu0 0.0
  %276 = vmatpush1.msra.mxu0 0.0
  %277 = vmatprep.subr.mxu0 0.0
  %278 = vmatpush1.msra.mxu0 0.0
  %279 = vmatprep.subr.mxu0 0.0
  %280 = vmatpush1.msra.mxu0 0.0
  %281 = vmatprep.subr.mxu0 0.0
  %282 = vmatpush1.msra.mxu0 0.0
  %283 = vmatprep.subr.mxu0 0.0
  %284 = vmatpush1.msra.mxu0 0.0
  %285 = vmatprep.subr.mxu0 0.0
  %286 = vmatpush1.msra.mxu0 0.0
  %287 = vmatprep.subr.mxu0 0.0
  %288 = vmatpush1.msra.mxu0 0.0
  %289 = vmatprep.subr.mxu0 0.0
  %290 = vmatpush1.msra.mxu0 0.0
  %291 = vmatprep.subr.mxu0 0.0
  %292 = vmatpush1.msra.mxu0 0.0
  %293 = vmatprep.mubr.f32.mxu0 0.0
  %294 = vmatmul.mubr.f32.gmra.mrb[0].mxu0 %v226
  %v295 = vpop.f32.mrb[0].mxu0
  %v296 = vadd.f32 %v228, %v295
  %v297 = vpop.f32.mrb[0].mxu0
  %298 = vdwg.mxu0
  %v299 = vtanh.pop %v296
  %s300 = scalar_lea.vmem [#allocation2], 24
  %v301 = vld [vmem:[%s300] sm:$0xff]
  %302 = vmatprep.subr.mxu0 0.0
  %303 = vmatpush1.msra.mxu0 %v136
  %304 = vmatprep.subr.mxu0 0.0
  %305 = vmatpush1.msra.mxu0 %v137
  %306 = vmatprep.subr.mxu0 0.0
  %307 = vmatpush1.msra.mxu0 %v138
  %308 = vmatprep.subr.mxu0 0.0
  %309 = vmatpush1.msra.mxu0 %v139
  %310 = vmatprep.subr.mxu0 0.0
  %311 = vmatpush1.msra.mxu0 %v140
  %312 = vmatprep.subr.mxu0 0.0
  %313 = vmatpush1.msra.mxu0 %v141
  %314 = vmatprep.subr.mxu0 0.0
  %315 = vmatpush1.msra.mxu0 %v142
  %316 = vmatprep.subr.mxu0 0.0
  %317 = vmatpush1.msra.mxu0 %v143
  %318 = vmatprep.subr.mxu0 0.0
  %319 = vmatpush1.msra.mxu0 %v144
  %320 = vmatprep.subr.mxu0 0.0
  %321 = vmatpush1.msra.mxu0 %v145
  %322 = vmatprep.subr.mxu0 0.0
  %323 = vmatpush1.msra.mxu0 %v146
  %324 = vmatprep.subr.mxu0 0.0
  %325 = vmatpush1.msra.mxu0 %v147
  %326 = vmatprep.subr.mxu0 0.0
  %327 = vmatpush1.msra.mxu0 %v148
  %328 = vmatprep.subr.mxu0 0.0
  %329 = vmatpush1.msra.mxu0 %v149
  %330 = vmatprep.subr.mxu0 0.0
  %331 = vmatpush1.msra.mxu0 %v150
  %332 = vmatprep.subr.mxu0 0.0
  %333 = vmatpush1.msra.mxu0 %v151
  %334 = vmatprep.subr.mxu0 0.0
  %335 = vmatpush1.msra.mxu0 0.0
  %336 = vmatprep.subr.mxu0 0.0
  %337 = vmatpush1.msra.mxu0 0.0
  %338 = vmatprep.subr.mxu0 0.0
  %339 = vmatpush1.msra.mxu0 0.0
  %340 = vmatprep.subr.mxu0 0.0
  %341 = vmatpush1.msra.mxu0 0.0
  %342 = vmatprep.subr.mxu0 0.0
  %343 = vmatpush1.msra.mxu0 0.0
  %344 = vmatprep.subr.mxu0 0.0
  %345 = vmatpush1.msra.mxu0 0.0
  %346 = vmatprep.subr.mxu0 0.0
  %347 = vmatpush1.msra.mxu0 0.0
  %348 = vmatprep.subr.mxu0 0.0
  %349 = vmatpush1.msra.mxu0 0.0
  %350 = vmatprep.subr.mxu0 0.0
  %351 = vmatpush1.msra.mxu0 0.0
  %352 = vmatprep.subr.mxu0 0.0
  %353 = vmatpush1.msra.mxu0 0.0
  %354 = vmatprep.subr.mxu0 0.0
  %355 = vmatpush1.msra.mxu0 0.0
  %356 = vmatprep.subr.mxu0 0.0
  %357 = vmatpush1.msra.mxu0 0.0
  %358 = vmatprep.subr.mxu0 0.0
  %359 = vmatpush1.msra.mxu0 0.0
  %360 = vmatprep.subr.mxu0 0.0
  %361 = vmatpush1.msra.mxu0 0.0
  %362 = vmatprep.subr.mxu0 0.0
  %363 = vmatpush1.msra.mxu0 0.0
  %364 = vmatprep.subr.mxu0 0.0
  %365 = vmatpush1.msra.mxu0 0.0
  %366 = vmatprep.mubr.f32.mxu0 0.0
  %367 = vmatmul.mubr.f32.gmra.mrb[0].mxu0 %v299
  %v368 = vpop.f32.mrb[0].mxu0
  %v369 = vadd.f32 %v301, %v368
  %v370 = vpop.f32.mrb[0].mxu0
  %371 = vdwg.mxu0
  %v372 = vtanh.pop %v369
  %s373 = scalar_lea.vmem [#allocation2], 32
  %v374 = vld [vmem:[%s373] sm:$0xff]
  %375 = vmatprep.subr.mxu0 0.0
  %376 = vmatpush1.msra.mxu0 %v136
  %377 = vmatprep.subr.mxu0 0.0
  %378 = vmatpush1.msra.mxu0 %v137
  %379 = vmatprep.subr.mxu0 0.0
  %380 = vmatpush1.msra.mxu0 %v138
  %381 = vmatprep.subr.mxu0 0.0
  %382 = vmatpush1.msra.mxu0 %v139
  %383 = vmatprep.subr.mxu0 0.0
  %384 = vmatpush1.msra.mxu0 %v140
  %385 = vmatprep.subr.mxu0 0.0
  %386 = vmatpush1.msra.mxu0 %v141
  %387 = vmatprep.subr.mxu0 0.0
  %388 = vmatpush1.msra.mxu0 %v142
  %389 = vmatprep.subr.mxu0 0.0
  %390 = vmatpush1.msra.mxu0 %v143
  %391 = vmatprep.subr.mxu0 0.0
  %392 = vmatpush1.msra.mxu0 %v144
  %393 = vmatprep.subr.mxu0 0.0
  %394 = vmatpush1.msra.mxu0 %v145
  %395 = vmatprep.subr.mxu0 0.0
  %396 = vmatpush1.msra.mxu0 %v146
  %397 = vmatprep.subr.mxu0 0.0
  %398 = vmatpush1.msra.mxu0 %v147
  %399 = vmatprep.subr.mxu0 0.0
  %400 = vmatpush1.msra.mxu0 %v148
  %401 = vmatprep.subr.mxu0 0.0
  %402 = vmatpush1.msra.mxu0 %v149
  %403 = vmatprep.subr.mxu0 0.0
  %404 = vmatpush1.msra.mxu0 %v150
  %405 = vmatprep.subr.mxu0 0.0
  %406 = vmatpush1.msra.mxu0 %v151
  %407 = vmatprep.subr.mxu0 0.0
  %408 = vmatpush1.msra.mxu0 0.0
  %409 = vmatprep.subr.mxu0 0.0
  %410 = vmatpush1.msra.mxu0 0.0
  %411 = vmatprep.subr.mxu0 0.0
  %412 = vmatpush1.msra.mxu0 0.0
  %413 = vmatprep.subr.mxu0 0.0
  %414 = vmatpush1.msra.mxu0 0.0
  %415 = vmatprep.subr.mxu0 0.0
  %416 = vmatpush1.msra.mxu0 0.0
  %417 = vmatprep.subr.mxu0 0.0
  %418 = vmatpush1.msra.mxu0 0.0
  %419 = vmatprep.subr.mxu0 0.0
  %420 = vmatpush1.msra.mxu0 0.0
  %421 = vmatprep.subr.mxu0 0.0
  %422 = vmatpush1.msra.mxu0 0.0
  %423 = vmatprep.subr.mxu0 0.0
  %424 = vmatpush1.msra.mxu0 0.0
  %425 = vmatprep.subr.mxu0 0.0
  %426 = vmatpush1.msra.mxu0 0.0
  %427 = vmatprep.subr.mxu0 0.0
  %428 = vmatpush1.msra.mxu0 0.0
  %429 = vmatprep.subr.mxu0 0.0
  %430 = vmatpush1.msra.mxu0 0.0
  %431 = vmatprep.subr.mxu0 0.0
  %432 = vmatpush1.msra.mxu0 0.0
  %433 = vmatprep.subr.mxu0 0.0
  %434 = vmatpush1.msra.mxu0 0.0
  %435 = vmatprep.subr.mxu0 0.0
  %436 = vmatpush1.msra.mxu0 0.0
  %437 = vmatprep.subr.mxu0 0.0
  %438 = vmatpush1.msra.mxu0 0.0
  %439 = vmatprep.mubr.f32.mxu0 0.0
  %440 = vmatmul.mubr.f32.gmra.mrb[0].mxu0 %v372
  %v441 = vpop.f32.mrb[0].mxu0
  %v442 = vadd.f32 %v374, %v441
  %v443 = vpop.f32.mrb[0].mxu0
  %444 = vdwg.mxu0
  %v445 = vtanh.pop %v442
  %s446 = scalar_lea.vmem [#allocation2], 40
  %v447 = vld [vmem:[%s446] sm:$0xff]
  %448 = vmatprep.subr.mxu0 0.0
  %449 = vmatpush1.msra.mxu0 %v136
  %450 = vmatprep.subr.mxu0 0.0
  %451 = vmatpush1.msra.mxu0 %v137
  %452 = vmatprep.subr.mxu0 0.0
  %453 = vmatpush1.msra.mxu0 %v138
  %454 = vmatprep.subr.mxu0 0.0
  %455 = vmatpush1.msra.mxu0 %v139
  %456 = vmatprep.subr.mxu0 0.0
  %457 = vmatpush1.msra.mxu0 %v140
  %458 = vmatprep.subr.mxu0 0.0
  %459 = vmatpush1.msra.mxu0 %v141
  %460 = vmatprep.subr.mxu0 0.0
  %461 = vmatpush1.msra.mxu0 %v142
  %462 = vmatprep.subr.mxu0 0.0
  %463 = vmatpush1.msra.mxu0 %v143
  %464 = vmatprep.subr.mxu0 0.0
  %465 = vmatpush1.msra.mxu0 %v144
  %466 = vmatprep.subr.mxu0 0.0
  %467 = vmatpush1.msra.mxu0 %v145
  %468 = vmatprep.subr.mxu0 0.0
  %469 = vmatpush1.msra.mxu0 %v146
  %470 = vmatprep.subr.mxu0 0.0
  %471 = vmatpush1.msra.mxu0 %v147
  %472 = vmatprep.subr.mxu0 0.0
  %473 = vmatpush1.msra.mxu0 %v148
  %474 = vmatprep.subr.mxu0 0.0
  %475 = vmatpush1.msra.mxu0 %v149
  %476 = vmatprep.subr.mxu0 0.0
  %477 = vmatpush1.msra.mxu0 %v150
  %478 = vmatprep.subr.mxu0 0.0
  %479 = vmatpush1.msra.mxu0 %v151
  %480 = vmatprep.subr.mxu0 0.0
  %481 = vmatpush1.msra.mxu0 0.0
  %482 = vmatprep.subr.mxu0 0.0
  %483 = vmatpush1.msra.mxu0 0.0
  %484 = vmatprep.subr.mxu0 0.0
  %485 = vmatpush1.msra.mxu0 0.0
  %486 = vmatprep.subr.mxu0 0.0
  %487 = vmatpush1.msra.mxu0 0.0
  %488 = vmatprep.subr.mxu0 0.0
  %489 = vmatpush1.msra.mxu0 0.0
  %490 = vmatprep.subr.mxu0 0.0
  %491 = vmatpush1.msra.mxu0 0.0
  %492 = vmatprep.subr.mxu0 0.0
  %493 = vmatpush1.msra.mxu0 0.0
  %494 = vmatprep.subr.mxu0 0.0
  %495 = vmatpush1.msra.mxu0 0.0
  %496 = vmatprep.subr.mxu0 0.0
  %497 = vmatpush1.msra.mxu0 0.0
  %498 = vmatprep.subr.mxu0 0.0
  %499 = vmatpush1.msra.mxu0 0.0
  %500 = vmatprep.subr.mxu0 0.0
  %501 = vmatpush1.msra.mxu0 0.0
  %502 = vmatprep.subr.mxu0 0.0
  %503 = vmatpush1.msra.mxu0 0.0
  %504 = vmatprep.subr.mxu0 0.0
  %505 = vmatpush1.msra.mxu0 0.0
  %506 = vmatprep.subr.mxu0 0.0
  %507 = vmatpush1.msra.mxu0 0.0
  %508 = vmatprep.subr.mxu0 0.0
  %509 = vmatpush1.msra.mxu0 0.0
  %510 = vmatprep.subr.mxu0 0.0
  %511 = vmatpush1.msra.mxu0 0.0
  %512 = vmatprep.mubr.f32.mxu0 0.0
  %513 = vmatmul.mubr.f32.gmra.mrb[0].mxu0 %v445
  %v514 = vpop.f32.mrb[0].mxu0
  %v515 = vadd.f32 %v447, %v514
  %v516 = vpop.f32.mrb[0].mxu0
  %517 = vdwg.mxu0
  %v518 = vtanh.pop %v515
  %s519 = scalar_lea.vmem [#allocation2], 48
  %v520 = vld [vmem:[%s519] sm:$0xff]
  %521 = vmatprep.subr.mxu0 0.0
  %522 = vmatpush1.msra.mxu0 %v136
  %523 = vmatprep.subr.mxu0 0.0
  %524 = vmatpush1.msra.mxu0 %v137
  %525 = vmatprep.subr.mxu0 0.0
  %526 = vmatpush1.msra.mxu0 %v138
  %527 = vmatprep.subr.mxu0 0.0
  %528 = vmatpush1.msra.mxu0 %v139
  %529 = vmatprep.subr.mxu0 0.0
  %530 = vmatpush1.msra.mxu0 %v140
  %531 = vmatprep.subr.mxu0 0.0
  %532 = vmatpush1.msra.mxu0 %v141
  %533 = vmatprep.subr.mxu0 0.0
  %534 = vmatpush1.msra.mxu0 %v142
  %535 = vmatprep.subr.mxu0 0.0
  %536 = vmatpush1.msra.mxu0 %v143
  %537 = vmatprep.subr.mxu0 0.0
  %538 = vmatpush1.msra.mxu0 %v144
  %539 = vmatprep.subr.mxu0 0.0
  %540 = vmatpush1.msra.mxu0 %v145
  %541 = vmatprep.subr.mxu0 0.0
  %542 = vmatpush1.msra.mxu0 %v146
  %543 = vmatprep.subr.mxu0 0.0
  %544 = vmatpush1.msra.mxu0 %v147
  %545 = vmatprep.subr.mxu0 0.0
  %546 = vmatpush1.msra.mxu0 %v148
  %547 = vmatprep.subr.mxu0 0.0
  %548 = vmatpush1.msra.mxu0 %v149
  %549 = vmatprep.subr.mxu0 0.0
  %550 = vmatpush1.msra.mxu0 %v150
  %551 = vmatprep.subr.mxu0 0.0
  %552 = vmatpush1.msra.mxu0 %v151
  %553 = vmatprep.subr.mxu0 0.0
  %554 = vmatpush1.msra.mxu0 0.0
  %555 = vmatprep.subr.mxu0 0.0
  %556 = vmatpush1.msra.mxu0 0.0
  %557 = vmatprep.subr.mxu0 0.0
  %558 = vmatpush1.msra.mxu0 0.0
  %559 = vmatprep.subr.mxu0 0.0
  %560 = vmatpush1.msra.mxu0 0.0
  %561 = vmatprep.subr.mxu0 0.0
  %562 = vmatpush1.msra.mxu0 0.0
  %563 = vmatprep.subr.mxu0 0.0
  %564 = vmatpush1.msra.mxu0 0.0
  %565 = vmatprep.subr.mxu0 0.0
  %566 = vmatpush1.msra.mxu0 0.0
  %567 = vmatprep.subr.mxu0 0.0
  %568 = vmatpush1.msra.mxu0 0.0
  %569 = vmatprep.subr.mxu0 0.0
  %570 = vmatpush1.msra.mxu0 0.0
  %571 = vmatprep.subr.mxu0 0.0
  %572 = vmatpush1.msra.mxu0 0.0
  %573 = vmatprep.subr.mxu0 0.0
  %574 = vmatpush1.msra.mxu0 0.0
  %575 = vmatprep.subr.mxu0 0.0
  %576 = vmatpush1.msra.mxu0 0.0
  %577 = vmatprep.subr.mxu0 0.0
  %578 = vmatpush1.msra.mxu0 0.0
  %579 = vmatprep.subr.mxu0 0.0
  %580 = vmatpush1.msra.mxu0 0.0
  %581 = vmatprep.subr.mxu0 0.0
  %582 = vmatpush1.msra.mxu0 0.0
  %583 = vmatprep.subr.mxu0 0.0
  %584 = vmatpush1.msra.mxu0 0.0
  %585 = vmatprep.mubr.f32.mxu0 0.0
  %586 = vmatmul.mubr.f32.gmra.mrb[0].mxu0 %v518
  %v587 = vpop.f32.mrb[0].mxu0
  %v588 = vadd.f32 %v520, %v587
  %v589 = vpop.f32.mrb[0].mxu0
  %590 = vdwg.mxu0
  %v591 = vtanh.pop %v588
  %s592 = scalar_lea.vmem [#allocation2], 56
  %v593 = vld [vmem:[%s592] sm:$0xff]
  %594 = vmatprep.subr.mxu0 0.0
  %595 = vmatpush1.msra.mxu0 %v136
  %596 = vmatprep.subr.mxu0 0.0
  %597 = vmatpush1.msra.mxu0 %v137
  %598 = vmatprep.subr.mxu0 0.0
  %599 = vmatpush1.msra.mxu0 %v138
  %600 = vmatprep.subr.mxu0 0.0
  %601 = vmatpush1.msra.mxu0 %v139
  %602 = vmatprep.subr.mxu0 0.0
  %603 = vmatpush1.msra.mxu0 %v140
  %604 = vmatprep.subr.mxu0 0.0
  %605 = vmatpush1.msra.mxu0 %v141
  %606 = vmatprep.subr.mxu0 0.0
  %607 = vmatpush1.msra.mxu0 %v142
  %608 = vmatprep.subr.mxu0 0.0
  %609 = vmatpush1.msra.mxu0 %v143
  %610 = vmatprep.subr.mxu0 0.0
  %611 = vmatpush1.msra.mxu0 %v144
  %612 = vmatprep.subr.mxu0 0.0
  %613 = vmatpush1.msra.mxu0 %v145
  %614 = vmatprep.subr.mxu0 0.0
  %615 = vmatpush1.msra.mxu0 %v146
  %616 = vmatprep.subr.mxu0 0.0
  %617 = vmatpush1.msra.mxu0 %v147
  %618 = vmatprep.subr.mxu0 0.0
  %619 = vmatpush1.msra.mxu0 %v148
  %620 = vmatprep.subr.mxu0 0.0
  %621 = vmatpush1.msra.mxu0 %v149
  %622 = vmatprep.subr.mxu0 0.0
  %623 = vmatpush1.msra.mxu0 %v150
  %624 = vmatprep.subr.mxu0 0.0
  %625 = vmatpush1.msra.mxu0 %v151
  %626 = vmatprep.subr.mxu0 0.0
  %627 = vmatpush1.msra.mxu0 0.0
  %628 = vmatprep.subr.mxu0 0.0
  %629 = vmatpush1.msra.mxu0 0.0
  %630 = vmatprep.subr.mxu0 0.0
  %631 = vmatpush1.msra.mxu0 0.0
  %632 = vmatprep.subr.mxu0 0.0
  %633 = vmatpush1.msra.mxu0 0.0
  %634 = vmatprep.subr.mxu0 0.0
  %635 = vmatpush1.msra.mxu0 0.0
  %636 = vmatprep.subr.mxu0 0.0
  %637 = vmatpush1.msra.mxu0 0.0
  %638 = vmatprep.subr.mxu0 0.0
  %639 = vmatpush1.msra.mxu0 0.0
  %640 = vmatprep.subr.mxu0 0.0
  %641 = vmatpush1.msra.mxu0 0.0
  %642 = vmatprep.subr.mxu0 0.0
  %643 = vmatpush1.msra.mxu0 0.0
  %644 = vmatprep.subr.mxu0 0.0
  %645 = vmatpush1.msra.mxu0 0.0
  %646 = vmatprep.subr.mxu0 0.0
  %647 = vmatpush1.msra.mxu0 0.0
  %648 = vmatprep.subr.mxu0 0.0
  %649 = vmatpush1.msra.mxu0 0.0
  %650 = vmatprep.subr.mxu0 0.0
  %651 = vmatpush1.msra.mxu0 0.0
  %652 = vmatprep.subr.mxu0 0.0
  %653 = vmatpush1.msra.mxu0 0.0
  %654 = vmatprep.subr.mxu0 0.0
  %655 = vmatpush1.msra.mxu0 0.0
  %656 = vmatprep.subr.mxu0 0.0
  %657 = vmatpush1.msra.mxu0 0.0
  %658 = vmatprep.mubr.f32.mxu0 0.0
  %659 = vmatmul.mubr.f32.gmra.mrb[0].mxu0 %v591
  %v660 = vpop.f32.mrb[0].mxu0
  %v661 = vadd.f32 %v593, %v660
  %v662 = vpop.f32.mrb[0].mxu0
  %663 = vdwg.mxu0
  %v664 = vtanh.pop %v661
  %s665 = scalar_lea.vmem [#allocation2], 64
  %v666 = vld [vmem:[%s665] sm:$0xff]
  %667 = vmatprep.subr.mxu0 0.0
  %668 = vmatpush1.msra.mxu0 %v136
  %669 = vmatprep.subr.mxu0 0.0
  %670 = vmatpush1.msra.mxu0 %v137
  %671 = vmatprep.subr.mxu0 0.0
  %672 = vmatpush1.msra.mxu0 %v138
  %673 = vmatprep.subr.mxu0 0.0
  %674 = vmatpush1.msra.mxu0 %v139
  %675 = vmatprep.subr.mxu0 0.0
  %676 = vmatpush1.msra.mxu0 %v140
  %677 = vmatprep.subr.mxu0 0.0
  %678 = vmatpush1.msra.mxu0 %v141
  %679 = vmatprep.subr.mxu0 0.0
  %680 = vmatpush1.msra.mxu0 %v142
  %681 = vmatprep.subr.mxu0 0.0
  %682 = vmatpush1.msra.mxu0 %v143
  %683 = vmatprep.subr.mxu0 0.0
  %684 = vmatpush1.msra.mxu0 %v144
  %685 = vmatprep.subr.mxu0 0.0
  %686 = vmatpush1.msra.mxu0 %v145
  %687 = vmatprep.subr.mxu0 0.0
  %688 = vmatpush1.msra.mxu0 %v146
  %689 = vmatprep.subr.mxu0 0.0
  %690 = vmatpush1.msra.mxu0 %v147
  %691 = vmatprep.subr.mxu0 0.0
  %692 = vmatpush1.msra.mxu0 %v148
  %693 = vmatprep.subr.mxu0 0.0
  %694 = vmatpush1.msra.mxu0 %v149
  %695 = vmatprep.subr.mxu0 0.0
  %696 = vmatpush1.msra.mxu0 %v150
  %697 = vmatprep.subr.mxu0 0.0
  %698 = vmatpush1.msra.mxu0 %v151
  %699 = vmatprep.subr.mxu0 0.0
  %700 = vmatpush1.msra.mxu0 0.0
  %701 = vmatprep.subr.mxu0 0.0
  %702 = vmatpush1.msra.mxu0 0.0
  %703 = vmatprep.subr.mxu0 0.0
  %704 = vmatpush1.msra.mxu0 0.0
  %705 = vmatprep.subr.mxu0 0.0
  %706 = vmatpush1.msra.mxu0 0.0
  %707 = vmatprep.subr.mxu0 0.0
  %708 = vmatpush1.msra.mxu0 0.0
  %709 = vmatprep.subr.mxu0 0.0
  %710 = vmatpush1.msra.mxu0 0.0
  %711 = vmatprep.subr.mxu0 0.0
  %712 = vmatpush1.msra.mxu0 0.0
  %713 = vmatprep.subr.mxu0 0.0
  %714 = vmatpush1.msra.mxu0 0.0
  %715 = vmatprep.subr.mxu0 0.0
  %716 = vmatpush1.msra.mxu0 0.0
  %717 = vmatprep.subr.mxu0 0.0
  %718 = vmatpush1.msra.mxu0 0.0
  %719 = vmatprep.subr.mxu0 0.0
  %720 = vmatpush1.msra.mxu0 0.0
  %721 = vmatprep.subr.mxu0 0.0
  %722 = vmatpush1.msra.mxu0 0.0
  %723 = vmatprep.subr.mxu0 0.0
  %724 = vmatpush1.msra.mxu0 0.0
  %725 = vmatprep.subr.mxu0 0.0
  %726 = vmatpush1.msra.mxu0 0.0
  %727 = vmatprep.subr.mxu0 0.0
  %728 = vmatpush1.msra.mxu0 0.0
  %729 = vmatprep.subr.mxu0 0.0
  %730 = vmatpush1.msra.mxu0 0.0
  %731 = vmatprep.mubr.f32.mxu0 0.0
  %732 = vmatmul.mubr.f32.gmra.mrb[0].mxu0 %v664
  %v733 = vpop.f32.mrb[0].mxu0
  %v734 = vadd.f32 %v666, %v733
  %v735 = vpop.f32.mrb[0].mxu0
  %736 = vdwg.mxu0
  %v737 = vtanh.pop %v734
  %v738 = vld [vmem:[%s5] sm:$0xff]
  %v739 = vld [vmem:[%s5 + $0x8] sm:$0xff]
  %v740 = vld [vmem:[%s5 + $0x10] sm:$0xff]
  %v741 = vld [vmem:[%s5 + $0x18] sm:$0xff]
  %v742 = vld [vmem:[%s5 + $0x20] sm:$0xff]
  %v743 = vld [vmem:[%s5 + $0x28] sm:$0xff]
  %v744 = vld [vmem:[%s5 + $0x30] sm:$0xff]
  %v745 = vld [vmem:[%s5 + $0x38] sm:$0xff]
  %v746 = vld [vmem:[%s5 + $0x40] sm:$0xff]
  %v747 = vld [vmem:[%s5 + $0x48] sm:$0xff]
  %v748 = vld [vmem:[%s5 + $0x50] sm:$0xff]
  %v749 = vld [vmem:[%s5 + $0x58] sm:$0xff]
  %v750 = vld [vmem:[%s5 + $0x60] sm:$0xff]
  %v751 = vld [vmem:[%s5 + $0x68] sm:$0xff]
  %v752 = vld [vmem:[%s5 + $0x70] sm:$0xff]
  %v753 = vld [vmem:[%s5 + $0x78] sm:$0xff]
  %v754 = vld [vmem:[%s6] sm:$0x1]
  %v756 = vlaneseq
  %v757 = vshrl.u32 %v756, 7
  %v758 = vsub.s32 0, %v757
  %v759 = vrot.slane %v754, %v758
  %761 = vmatprep.subr.mxu0 0.0
  %762 = vmatpush1.msra.mxu0 %v738
  %763 = vmatprep.subr.mxu0 0.0
  %764 = vmatpush1.msra.mxu0 %v739
  %765 = vmatprep.subr.mxu0 0.0
  %766 = vmatpush1.msra.mxu0 %v740
  %767 = vmatprep.subr.mxu0 0.0
  %768 = vmatpush1.msra.mxu0 %v741
  %769 = vmatprep.subr.mxu0 0.0
  %770 = vmatpush1.msra.mxu0 %v742
  %771 = vmatprep.subr.mxu0 0.0
  %772 = vmatpush1.msra.mxu0 %v743
  %773 = vmatprep.subr.mxu0 0.0
  %774 = vmatpush1.msra.mxu0 %v744
  %775 = vmatprep.subr.mxu0 0.0
  %776 = vmatpush1.msra.mxu0 %v745
  %777 = vmatprep.subr.mxu0 0.0
  %778 = vmatpush1.msra.mxu0 %v746
  %779 = vmatprep.subr.mxu0 0.0
  %780 = vmatpush1.msra.mxu0 %v747
  %781 = vmatprep.subr.mxu0 0.0
  %782 = vmatpush1.msra.mxu0 %v748
  %783 = vmatprep.subr.mxu0 0.0
  %784 = vmatpush1.msra.mxu0 %v749
  %785 = vmatprep.subr.mxu0 0.0
  %786 = vmatpush1.msra.mxu0 %v750
  %787 = vmatprep.subr.mxu0 0.0
  %788 = vmatpush1.msra.mxu0 %v751
  %789 = vmatprep.subr.mxu0 0.0
  %790 = vmatpush1.msra.mxu0 %v752
  %791 = vmatprep.subr.mxu0 0.0
  %792 = vmatpush1.msra.mxu0 %v753
  %793 = vmatprep.subr.mxu0 0.0
  %794 = vmatpush1.msra.mxu0 0.0
  %795 = vmatprep.subr.mxu0 0.0
  %796 = vmatpush1.msra.mxu0 0.0
  %797 = vmatprep.subr.mxu0 0.0
  %798 = vmatpush1.msra.mxu0 0.0
  %799 = vmatprep.subr.mxu0 0.0
  %800 = vmatpush1.msra.mxu0 0.0
  %801 = vmatprep.subr.mxu0 0.0
  %802 = vmatpush1.msra.mxu0 0.0
  %803 = vmatprep.subr.mxu0 0.0
  %804 = vmatpush1.msra.mxu0 0.0
  %805 = vmatprep.subr.mxu0 0.0
  %806 = vmatpush1.msra.mxu0 0.0
  %807 = vmatprep.subr.mxu0 0.0
  %808 = vmatpush1.msra.mxu0 0.0
  %809 = vmatprep.subr.mxu0 0.0
  %810 = vmatpush1.msra.mxu0 0.0
  %811 = vmatprep.subr.mxu0 0.0
  %812 = vmatpush1.msra.mxu0 0.0
  %813 = vmatprep.subr.mxu0 0.0
  %814 = vmatpush1.msra.mxu0 0.0
  %815 = vmatprep.subr.mxu0 0.0
  %816 = vmatpush1.msra.mxu0 0.0
  %817 = vmatprep.subr.mxu0 0.0
  %818 = vmatpush1.msra.mxu0 0.0
  %819 = vmatprep.subr.mxu0 0.0
  %820 = vmatpush1.msra.mxu0 0.0
  %821 = vmatprep.subr.mxu0 0.0
  %822 = vmatpush1.msra.mxu0 0.0
  %823 = vmatprep.subr.mxu0 0.0
  %824 = vmatpush1.msra.mxu0 0.0
  %825 = vmatprep.mubr.f32.mxu0 0.0
  %826 = vmatmul.mubr.f32.gmra.mrb[0].mxu0 %v737
  %v827 = vpop.f32.mrb[0].mxu0
  %v828 = vadd.f32 %v759, %v827
  %v829 = vpop.f32.mrb[0].mxu0
  %830 = vdwg.mxu0
  %vm831 = vcmask 31744
  %832 = vst.msk [vmem:[%s7] sm:$0xff] %vm831, %v828
  // Predicated region
  $region30: #{tpu_custom_call.1} parent=0 // pred_check
    _
  $region31: #{tpu_custom_call.1} parent=0 // pred_check_branch
    %834 = sbr.rel (0) target = $region33
  $region32: #{tpu_custom_call.1} parent=0 // pred_region
    _
  $region33: #{tpu_custom_call.1} parent=0 // pred_fallthru
    _
  // Predicated region
  $region34: #{tpu_custom_call.1} parent=0 // pred_check
    _
  $region35: #{tpu_custom_call.1} parent=0 // pred_check_branch
    %836 = sbr.rel (0) target = $region37
  $region36: #{tpu_custom_call.1} parent=0 // pred_region
    _
  $region37: #{tpu_custom_call.1} parent=0 // pred_fallthru
    _

</llo_original>
